<compile_context>
chip_gen: v7x
topology: tpu7x:2x2x1
jax: 0.10.0
libtpu: 0.0.40
codegen_flags: <defaults>
</compile_context>

<pallas_src>
import functools

import jax
import jax.numpy as jnp
from jax.experimental import pallas as pl
from jax.experimental.pallas import tpu as pltpu

IMG_SHAPE = (2,)
IN_FEATURES = 2
H1 = 512
H2 = 256
OUT = 1
NEG_SLOPE = 0.2


def _leaky_relu(x, negative_slope=NEG_SLOPE):
    return jnp.where(x > 0, x, negative_slope * x)


def _round_up(n, m):
    return ((n + m - 1) // m) * m


def discriminator_kernel(x_ref, w1_ref, b1_ref, w2_ref, b2_ref, w3_ref, b3_ref,
                         o_ref):
    """One TILE_B-row slab of the fused MLP.

    x_ref : (TILE_B, 2)    w1_ref: (2, 512)   b1_ref: (1, 512)
    w2_ref: (512, 256)     b2_ref: (1, 256)
    w3_ref: (1, 256)       b3_ref: (1, 1)     o_ref : (TILE_B, 1)
    """
    # ---- Layer 1: Linear(2 -> 512) as a VPU outer product -------------------
    # A K=2 contraction wastes >98% of the MXU's systolic passes; two
    # column-broadcast vmul + vadd on the VALU are strictly cheaper and leave
    # the MXU free for layer 2.  The (TILE_B, 2) input is only read as two
    # single-lane column slices (no (TILE_B, 2) intermediate kept hot).
    h1 = (x_ref[:, 0:1] * w1_ref[0:1, :]
          + x_ref[:, 1:2] * w1_ref[1:2, :]
          + b1_ref[...])                                       # (TILE_B, 512)
    h1 = _leaky_relu(h1)

    # ---- Layer 2: Linear(512 -> 256) -- the only real MXU work --------------
    # Kept f32-in / f32-accumulate to match the torch module's numerics;
    # casting h1 / w2 to bf16 here would ~2x MXU throughput on v6e/v7x.
    h2 = jnp.dot(h1, w2_ref[...], preferred_element_type=jnp.float32)
    h2 = _leaky_relu(h2 + b2_ref[...])                         # (TILE_B, 256)

    # ---- Layer 3: Linear(256 -> 1) as VPU multiply + XLU lane reduction -----
    # An N=1 matmul would use a single MXU output column and drain the MRF/MRB
    # for one lane; a vmul + cross-lane reduce uses otherwise-idle units.
    out = jnp.sum(h2 * w3_ref[...], axis=-1, keepdims=True) + b3_ref[...]
    o_ref[...] = out.astype(o_ref.dtype)                       # (TILE_B, 1)


@functools.partial(jax.jit, static_argnames=("tile_b",))
def discriminator_forward(img, params, *, tile_b=1024):
    """img: (B, *IMG_SHAPE) float32 -> validity (B, 1) float32."""
    w1, b1, w2, b2, w3, b3 = params
    B = img.shape[0]
    x = img.reshape(B, -1).astype(jnp.float32)                 # (B, 2)

    # Lane-aligned batch tile (multiple of 128), clamped so tiny batches do
    # not over-pad; pad the batch to a whole number of tiles.
    tile_b = min(tile_b, _round_up(B, 128))
    b_pad = _round_up(B, tile_b)
    if b_pad != B:
        x = jnp.pad(x, ((0, b_pad - B), (0, 0)))
    num_tiles = b_pad // tile_b

    w3_row = w3.reshape(1, H2)                                 # (1, 256) for lane-wise mul

    def resident(shape):  # full-shape block, constant index -> no re-DMA per step
        return pl.BlockSpec(shape, lambda i: (0, 0))

    out = pl.pallas_call(
        discriminator_kernel,
        out_shape=jax.ShapeDtypeStruct((b_pad, OUT), jnp.float32),
        grid=(num_tiles,),
        in_specs=[
            pl.BlockSpec((tile_b, IN_FEATURES), lambda i: (i, 0)),  # x (pipelined)
            resident((IN_FEATURES, H1)),                            # w1
            resident((1, H1)),                                      # b1
            resident((H1, H2)),                                     # w2
            resident((1, H2)),                                      # b2
            resident((1, H2)),                                      # w3 (row)
            resident((1, OUT)),                                     # b3
        ],
        out_specs=pl.BlockSpec((tile_b, OUT), lambda i: (i, 0)),
        compiler_params=pltpu.CompilerParams(
            dimension_semantics=("parallel",)),
    )(x, w1, b1, w2, b2, w3_row, b3)

    return out[:B]                                             # (B, 1)


def init_params(key):
    """torch.nn.Linear-style init (uniform +/- 1/sqrt(fan_in)).

    Weights stored as (in_features, out_features); biases as (1, out_features).
    """
    ks = jax.random.split(key, 6)

    def linear(kw, kb, fan_in, fan_out):
        bound = 1.0 / jnp.sqrt(jnp.float32(fan_in))
        w = jax.random.uniform(kw, (fan_in, fan_out), jnp.float32, -bound, bound)
        b = jax.random.uniform(kb, (1, fan_out), jnp.float32, -bound, bound)
        return w, b

    w1, b1 = linear(ks[0], ks[1], IN_FEATURES, H1)
    w2, b2 = linear(ks[2], ks[3], H1, H2)
    w3, b3 = linear(ks[4], ks[5], H2, OUT)
    return (w1, b1, w2, b2, w3, b3)


def reference_forward(img, params):
    """Pure-JAX reference for correctness checking."""
    w1, b1, w2, b2, w3, b3 = params
    x = img.reshape(img.shape[0], -1).astype(jnp.float32)
    h1 = _leaky_relu(x @ w1 + b1)
    h2 = _leaky_relu(h1 @ w2 + b2)
    return h2 @ w3 + b3


if __name__ == "__main__":
    key = jax.random.PRNGKey(0)
    k_param, k_img = jax.random.split(key)

    params = init_params(k_param)
    img = jax.random.normal(k_img, (8,) + IMG_SHAPE, dtype=jnp.float32)  # (B, 2)

    out = jax.block_until_ready(discriminator_forward(img, params))
    ref = jax.block_until_ready(reference_forward(img, params))

    assert out.shape == (8, 1), out.shape
    assert jnp.allclose(out, ref, atol=1e-4, rtol=1e-4), (out, ref)

    print("KERNEL_OK")
</pallas_src>

<mosaic_0001>
module attributes {stable_mosaic.version = 11 : i64} {
  func.func @discriminator_kernel(%arg0: i32, %arg1: memref<128x2xf32, #tpu.memory_space<vmem>>, %arg2: memref<2x512xf32, #tpu.memory_space<vmem>>, %arg3: memref<1x512xf32, #tpu.memory_space<vmem>>, %arg4: memref<512x256xf32, #tpu.memory_space<vmem>>, %arg5: memref<1x256xf32, #tpu.memory_space<vmem>>, %arg6: memref<1x256xf32, #tpu.memory_space<vmem>>, %arg7: memref<1x1xf32, #tpu.memory_space<vmem>>, %arg8: memref<128x1xf32, #tpu.memory_space<vmem>>) attributes {dimension_semantics = [#tpu.dimension_semantics<parallel>], iteration_bounds = array<i64: 1>, scalar_prefetch = 0 : i64, scratch_operands = 0 : i64, tpu.core_type = #tpu.core_type<tc>, window_params = [{transform_indices = @transform_0, window_bounds = array<i64: 128, 2>}, {pipeline_mode = #tpu.pipeline_mode<synchronous>, transform_indices = @transform_1, window_bounds = array<i64: 2, 512>}, {pipeline_mode = #tpu.pipeline_mode<synchronous>, transform_indices = @transform_2, window_bounds = array<i64: 1, 512>}, {pipeline_mode = #tpu.pipeline_mode<synchronous>, transform_indices = @transform_3, window_bounds = array<i64: 512, 256>}, {pipeline_mode = #tpu.pipeline_mode<synchronous>, transform_indices = @transform_4, window_bounds = array<i64: 1, 256>}, {pipeline_mode = #tpu.pipeline_mode<synchronous>, transform_indices = @transform_5, window_bounds = array<i64: 1, 256>}, {pipeline_mode = #tpu.pipeline_mode<synchronous>, transform_indices = @transform_6, window_bounds = array<i64: 1, 1>}, {transform_indices = @transform_7, window_bounds = array<i64: 128, 1>}]} {
    %c0 = arith.constant 0 : index
    %c0_0 = arith.constant 0 : index
    %0 = vector.load %arg1[%c0, %c0_0] : memref<128x2xf32, #tpu.memory_space<vmem>>, vector<128x1xf32>
    %c0_1 = arith.constant 0 : index
    %c0_2 = arith.constant 0 : index
    %1 = vector.load %arg2[%c0_1, %c0_2] : memref<2x512xf32, #tpu.memory_space<vmem>>, vector<1x512xf32>
    %2 = vector.broadcast %0 : vector<128x1xf32> to vector<128x512xf32>
    %3 = vector.broadcast %1 : vector<1x512xf32> to vector<128x512xf32>
    %4 = arith.mulf %2, %3 : vector<128x512xf32>
    %c0_3 = arith.constant 0 : index
    %c1 = arith.constant 1 : index
    %5 = vector.load %arg1[%c0_3, %c1] : memref<128x2xf32, #tpu.memory_space<vmem>>, vector<128x1xf32>
    %c1_4 = arith.constant 1 : index
    %c0_5 = arith.constant 0 : index
    %6 = vector.load %arg2[%c1_4, %c0_5] : memref<2x512xf32, #tpu.memory_space<vmem>>, vector<1x512xf32>
    %7 = vector.broadcast %5 : vector<128x1xf32> to vector<128x512xf32>
    %8 = vector.broadcast %6 : vector<1x512xf32> to vector<128x512xf32>
    %9 = arith.mulf %7, %8 : vector<128x512xf32>
    %10 = arith.addf %4, %9 : vector<128x512xf32>
    %c0_6 = arith.constant 0 : index
    %c0_7 = arith.constant 0 : index
    %11 = vector.load %arg3[%c0_6, %c0_7] : memref<1x512xf32, #tpu.memory_space<vmem>>, vector<1x512xf32>
    %12 = vector.broadcast %11 : vector<1x512xf32> to vector<128x512xf32>
    %13 = arith.addf %10, %12 : vector<128x512xf32>
    %cst = arith.constant 0.000000e+00 : f32
    %14 = vector.broadcast %cst : f32 to vector<128x512xf32>
    %15 = arith.cmpf ogt, %13, %14 : vector<128x512xf32>
    %cst_8 = arith.constant 2.000000e-01 : f32
    %16 = vector.broadcast %cst_8 : f32 to vector<128x512xf32>
    %17 = arith.mulf %16, %13 : vector<128x512xf32>
    %18 = arith.select %15, %13, %17 : vector<128x512xi1>, vector<128x512xf32>
    %c0_9 = arith.constant 0 : index
    %c0_10 = arith.constant 0 : index
    %19 = vector.load %arg4[%c0_9, %c0_10] : memref<512x256xf32, #tpu.memory_space<vmem>>, vector<512x256xf32>
    %cst_11 = arith.constant dense<0.000000e+00> : vector<128x256xf32>
    %20 = tpu.matmul %18, %19, %cst_11 {dimension_numbers = #tpu.dot_dimension_numbers<[1], [0], [0], [1], [0, 0, 1, 1], [], []>} : vector<128x512xf32>, vector<512x256xf32>, vector<128x256xf32> -> vector<128x256xf32>
    %c0_12 = arith.constant 0 : index
    %c0_13 = arith.constant 0 : index
    %21 = vector.load %arg5[%c0_12, %c0_13] : memref<1x256xf32, #tpu.memory_space<vmem>>, vector<1x256xf32>
    %22 = vector.broadcast %21 : vector<1x256xf32> to vector<128x256xf32>
    %23 = arith.addf %20, %22 : vector<128x256xf32>
    %cst_14 = arith.constant 0.000000e+00 : f32
    %24 = vector.broadcast %cst_14 : f32 to vector<128x256xf32>
    %25 = arith.cmpf ogt, %23, %24 : vector<128x256xf32>
    %cst_15 = arith.constant 2.000000e-01 : f32
    %26 = vector.broadcast %cst_15 : f32 to vector<128x256xf32>
    %27 = arith.mulf %26, %23 : vector<128x256xf32>
    %28 = arith.select %25, %23, %27 : vector<128x256xi1>, vector<128x256xf32>
    %c0_16 = arith.constant 0 : index
    %c0_17 = arith.constant 0 : index
    %29 = vector.load %arg6[%c0_16, %c0_17] : memref<1x256xf32, #tpu.memory_space<vmem>>, vector<1x256xf32>
    %30 = vector.broadcast %29 : vector<1x256xf32> to vector<128x256xf32>
    %31 = arith.mulf %28, %30 : vector<128x256xf32>
    %cst_18 = arith.constant dense<0.000000e+00> : vector<128xf32>
    %32 = vector.multi_reduction <add>, %31, %cst_18 [1] : vector<128x256xf32> to vector<128xf32>
    %33 = vector.shape_cast %32 : vector<128xf32> to vector<128x1xf32>
    %c0_19 = arith.constant 0 : index
    %c0_20 = arith.constant 0 : index
    %34 = vector.load %arg7[%c0_19, %c0_20] : memref<1x1xf32, #tpu.memory_space<vmem>>, vector<1x1xf32>
    %35 = vector.broadcast %34 : vector<1x1xf32> to vector<128x1xf32>
    %36 = arith.addf %33, %35 : vector<128x1xf32>
    %c0_21 = arith.constant 0 : index
    %c0_22 = arith.constant 0 : index
    %37 = vector.load %arg8[%c0_21, %c0_22] : memref<128x1xf32, #tpu.memory_space<vmem>>, vector<128x1xf32>
    tpu.vector_store %arg8[%c0_21, %c0_22], %36 {strides = array<i32>} : memref<128x1xf32, #tpu.memory_space<vmem>>, vector<128x1xf32>,
    return
  }
  func.func @transform_0(%arg0: i32) -> (i32, i32) {
    %c0_i32 = arith.constant 0 : i32
    %c0_i32_0 = arith.constant 0 : i32
    return %arg0, %c0_i32 : i32, i32
  }
  func.func @transform_1(%arg0: i32) -> (i32, i32) {
    %c0_i32 = arith.constant 0 : i32
    %c0_i32_0 = arith.constant 0 : i32
    %c0_i32_1 = arith.constant 0 : i32
    return %c0_i32, %c0_i32_0 : i32, i32
  }
  func.func @transform_2(%arg0: i32) -> (i32, i32) {
    %c0_i32 = arith.constant 0 : i32
    %c0_i32_0 = arith.constant 0 : i32
    %c0_i32_1 = arith.constant 0 : i32
    return %c0_i32, %c0_i32_0 : i32, i32
  }
  func.func @transform_3(%arg0: i32) -> (i32, i32) {
    %c0_i32 = arith.constant 0 : i32
    %c0_i32_0 = arith.constant 0 : i32
    %c0_i32_1 = arith.constant 0 : i32
    return %c0_i32, %c0_i32_0 : i32, i32
  }
  func.func @transform_4(%arg0: i32) -> (i32, i32) {
    %c0_i32 = arith.constant 0 : i32
    %c0_i32_0 = arith.constant 0 : i32
    %c0_i32_1 = arith.constant 0 : i32
    return %c0_i32, %c0_i32_0 : i32, i32
  }
  func.func @transform_5(%arg0: i32) -> (i32, i32) {
    %c0_i32 = arith.constant 0 : i32
    %c0_i32_0 = arith.constant 0 : i32
    %c0_i32_1 = arith.constant 0 : i32
    return %c0_i32, %c0_i32_0 : i32, i32
  }
  func.func @transform_6(%arg0: i32) -> (i32, i32) {
    %c0_i32 = arith.constant 0 : i32
    %c0_i32_0 = arith.constant 0 : i32
    %c0_i32_1 = arith.constant 0 : i32
    return %c0_i32, %c0_i32_0 : i32, i32
  }
  func.func @transform_7(%arg0: i32) -> (i32, i32) {
    %c0_i32 = arith.constant 0 : i32
    %c0_i32_0 = arith.constant 0 : i32
    return %arg0, %c0_i32 : i32, i32
  }
}

</mosaic_0001>

<llo_original>
// kernel: discriminator_forward.1
$region0: #{discriminator_forward.1}
  #allocation0 [shape = 'u32[]', space=smem, size = 0x4, offset = 0x4, fixed_abs, tag = 'smem constant byte address 0x4 - core index']
  #allocation1 [shape = 'u32[144,128]{1,0:T(1,128)}', space=vmem, size = 0x12000, scoped, tag = 'internal scratch']
  #allocation2 [shape = 'f32[1,1]{1,0:T(1,128)S(1)}', space=vmem, size = 0x200, scoped, tag = 'scoped memory for discriminator_forward.1']
  %s0 = inlined_call_operand.vmem [shape: f32[128,2], index: 0, kind: input, shape index: {}]
  %s1 = inlined_call_operand.vmem [shape: f32[2,512], index: 1, kind: input, shape index: {}]
  %s2 = inlined_call_operand.vmem [shape: f32[1,512], index: 2, kind: input, shape index: {}]
  %s3 = inlined_call_operand.hbm [shape: f32[512,256], index: 3, kind: input, shape index: {}]
  %s4 = inlined_call_operand.vmem [shape: f32[1,256], index: 4, kind: input, shape index: {}]
  %s5 = inlined_call_operand.vmem [shape: f32[1,256], index: 5, kind: input, shape index: {}]
  %s6 = inlined_call_operand.<no memory space> [shape: f32[1,1], index: 6, kind: input, shape index: {}]
  %s7 = inlined_call_operand.vmem [shape: f32[128,1], index: 7, kind: output, shape index: {}]
  %s8 = sld [smem:[#allocation0]]
  $region42: #{discriminator_forward.1} parent=0
    _
  %s10 = ssub.s32 1, %s8
  %s11 = scalar_select 0, %s10, %s8
  %v12 = vstv %s6
  %13 = vst [vmem:[#allocation2] sm:$0x1] %v12
  $region1: #{discriminator_forward.1} parent=0
    #allocation3 [shape = 'u8[524288]{0}', space=vmem, size = 0x80000, scoped, tag = 'input window, operand 3, single buffered']
    #allocation4 [shape = 's32[1]{0}', space=sflag, size = 0x4, scoped, tag = 'scoped memory for discriminator_forward.1']
    %14 = vsyncpa [#allocation4], 0
    // Predicated region
    $region2: #{discriminator_forward.1} parent=1 // pred_check
      _
    $region3: #{discriminator_forward.1} parent=1 // pred_check_branch
      %16 = sbr.rel (0) target = $region5
    $region4: #{discriminator_forward.1} parent=1 // pred_region
      _
    $region5: #{discriminator_forward.1} parent=1 // pred_fallthru
      _
    // Predicated region
    $region6: #{discriminator_forward.1} parent=1 // pred_check
      _
    $region7: #{discriminator_forward.1} parent=1 // pred_check_branch
      %18 = sbr.rel (0) target = $region9
    $region8: #{discriminator_forward.1} parent=1 // pred_region
      _
    $region9: #{discriminator_forward.1} parent=1 // pred_fallthru
      _
    // Predicated region
    $region10: #{discriminator_forward.1} parent=1 // pred_check
      _
    $region11: #{discriminator_forward.1} parent=1 // pred_check_branch
      %20 = sbr.rel (0) target = $region13
    $region12: #{discriminator_forward.1} parent=1 // pred_region
      _
    $region13: #{discriminator_forward.1} parent=1 // pred_fallthru
      _
    // Predicated region
    $region14: #{discriminator_forward.1} parent=1 // pred_check
      _
    $region15: #{discriminator_forward.1} parent=1 // pred_check_branch
      %22 = sbr.rel (0) target = $region17
    $region16: #{discriminator_forward.1} parent=1 // pred_region
      %s24 = ssub.s32 16384, 16384
      %25 = vsyncadd [#allocation4], %s24
      %s26 = sshll.u32 [#allocation3], 4
      %s27 = int_to_ptr.vmem [resolvable:$true] %s26
      %32 = dma.hbm_to_vmem [thread:$0]  %s3, 16384, %s27, [#allocation4], 256, 256, 16
    $region17: #{discriminator_forward.1} parent=1 // pred_fallthru
      _
    // Predicated region
    $region18: #{discriminator_forward.1} parent=1 // pred_check
      _
    $region19: #{discriminator_forward.1} parent=1 // pred_check_branch
      %34 = sbr.rel (0) target = $region21
    $region20: #{discriminator_forward.1} parent=1 // pred_region
      _
    $region21: #{discriminator_forward.1} parent=1 // pred_fallthru
      _
    // Predicated region
    $region22: #{discriminator_forward.1} parent=1 // pred_check
      _
    $region23: #{discriminator_forward.1} parent=1 // pred_check_branch
      %36 = sbr.rel (0) target = $region25
    $region24: #{discriminator_forward.1} parent=1 // pred_region
      _
    $region25: #{discriminator_forward.1} parent=1 // pred_fallthru
      _
    // Predicated region
    $region26: #{discriminator_forward.1} parent=1 // pred_check
      _
    $region27: #{discriminator_forward.1} parent=1 // pred_check_branch
      %38 = sbr.rel (0) target = $region29
    $region28: #{discriminator_forward.1} parent=1 // pred_region
      _
    $region29: #{discriminator_forward.1} parent=1 // pred_fallthru
      _
    // Predicated region
    $region30: #{discriminator_forward.1} parent=1 // pred_check
      _
    $region31: #{discriminator_forward.1} parent=1 // pred_check_branch
      %40 = sbr.rel (0) target = $region33
    $region32: #{discriminator_forward.1} parent=1 // pred_region
      %41 = dma.done [#allocation4], 16384
    $region33: #{discriminator_forward.1} parent=1 // pred_fallthru
      _
    %v42 = vld [vmem:[%s0] sm:$0xff]
    %v43 = vld [vmem:[%s0 + $0x8] sm:$0xff]
    %v44 = vld [vmem:[%s0 + $0x10] sm:$0xff]
    %v45 = vld [vmem:[%s0 + $0x18] sm:$0xff]
    %v46 = vld [vmem:[%s0 + $0x20] sm:$0xff]
    %v47 = vld [vmem:[%s0 + $0x28] sm:$0xff]
    %v48 = vld [vmem:[%s0 + $0x30] sm:$0xff]
    %v49 = vld [vmem:[%s0 + $0x38] sm:$0xff]
    %v50 = vld [vmem:[%s0 + $0x40] sm:$0xff]
    %v51 = vld [vmem:[%s0 + $0x48] sm:$0xff]
    %v52 = vld [vmem:[%s0 + $0x50] sm:$0xff]
    %v53 = vld [vmem:[%s0 + $0x58] sm:$0xff]
    %v54 = vld [vmem:[%s0 + $0x60] sm:$0xff]
    %v55 = vld [vmem:[%s0 + $0x68] sm:$0xff]
    %v56 = vld [vmem:[%s0 + $0x70] sm:$0xff]
    %v57 = vld [vmem:[%s0 + $0x78] sm:$0xff]
    %v58 = vld [vmem:[%s1] ss:$2 sm:$0xf]
    %60 = vset.pattern.permute.xlu0 0
    %61 = vperm.xlu0 %60, %v42
    %v62 = vpop.permute.xlu0 %61
    %65 = vset.pattern.permute.xlu0 0
    %66 = vperm.xlu0 %65, %v43
    %v67 = vpop.permute.xlu0 %66
    %70 = vset.pattern.permute.xlu0 0
    %71 = vperm.xlu0 %70, %v44
    %v72 = vpop.permute.xlu0 %71
    %75 = vset.pattern.permute.xlu0 0
    %76 = vperm.xlu0 %75, %v45
    %v77 = vpop.permute.xlu0 %76
    %80 = vset.pattern.permute.xlu0 0
    %81 = vperm.xlu0 %80, %v46
    %v82 = vpop.permute.xlu0 %81
    %85 = vset.pattern.permute.xlu0 0
    %86 = vperm.xlu0 %85, %v47
    %v87 = vpop.permute.xlu0 %86
    %90 = vset.pattern.permute.xlu0 0
    %91 = vperm.xlu0 %90, %v48
    %v92 = vpop.permute.xlu0 %91
    %95 = vset.pattern.permute.xlu0 0
    %96 = vperm.xlu0 %95, %v49
    %v97 = vpop.permute.xlu0 %96
    %100 = vset.pattern.permute.xlu0 0
    %101 = vperm.xlu0 %100, %v50
    %v102 = vpop.permute.xlu0 %101
    %105 = vset.pattern.permute.xlu0 0
    %106 = vperm.xlu0 %105, %v51
    %v107 = vpop.permute.xlu0 %106
    %110 = vset.pattern.permute.xlu0 0
    %111 = vperm.xlu0 %110, %v52
    %v112 = vpop.permute.xlu0 %111
    %115 = vset.pattern.permute.xlu0 0
    %116 = vperm.xlu0 %115, %v53
    %v117 = vpop.permute.xlu0 %116
    %120 = vset.pattern.permute.xlu0 0
    %121 = vperm.xlu0 %120, %v54
    %v122 = vpop.permute.xlu0 %121
    %125 = vset.pattern.permute.xlu0 0
    %126 = vperm.xlu0 %125, %v55
    %v127 = vpop.permute.xlu0 %126
    %130 = vset.pattern.permute.xlu0 0
    %131 = vperm.xlu0 %130, %v56
    %v132 = vpop.permute.xlu0 %131
    %135 = vset.pattern.permute.xlu0 0
    %136 = vperm.xlu0 %135, %v57
    %v137 = vpop.permute.xlu0 %136
    %v140 = vlaneseq
    %v141 = vshrl.u32 %v140, 7
    %v142 = vsub.s32 0, %v141
    %v143 = vrot.slane %v58, %v142
    %v144 = vlaneseq
    %v145 = vshrl.u32 %v144, 7
    %v146 = vsub.s32 1, %v145
    %v147 = vrot.slane %v58, %v146
    %v148 = vlaneseq
    %v149 = vshrl.u32 %v148, 7
    %v150 = vsub.s32 2, %v149
    %v151 = vrot.slane %v58, %v150
    %v152 = vlaneseq
    %v153 = vshrl.u32 %v152, 7
    %v154 = vsub.s32 3, %v153
    %v155 = vrot.slane %v58, %v154
    %v160 = vmul.f32 %v62, %v143
    %v161 = vmul.f32 %v62, %v147
    %v162 = vmul.f32 %v62, %v151
    %v163 = vmul.f32 %v62, %v155
    %v164 = vmul.f32 %v67, %v143
    %v165 = vmul.f32 %v67, %v147
    %v166 = vmul.f32 %v67, %v151
    %v167 = vmul.f32 %v67, %v155
    %v168 = vmul.f32 %v72, %v143
    %v169 = vmul.f32 %v72, %v147
    %v170 = vmul.f32 %v72, %v151
    %v171 = vmul.f32 %v72, %v155
    %v172 = vmul.f32 %v77, %v143
    %v173 = vmul.f32 %v77, %v147
    %v174 = vmul.f32 %v77, %v151
    %v175 = vmul.f32 %v77, %v155
    %v176 = vmul.f32 %v82, %v143
    %v177 = vmul.f32 %v82, %v147
    %v178 = vmul.f32 %v82, %v151
    %v179 = vmul.f32 %v82, %v155
    %v180 = vmul.f32 %v87, %v143
    %v181 = vmul.f32 %v87, %v147
    %v182 = vmul.f32 %v87, %v151
    %v183 = vmul.f32 %v87, %v155
    %v184 = vmul.f32 %v92, %v143
    %v185 = vmul.f32 %v92, %v147
    %v186 = vmul.f32 %v92, %v151
    %v187 = vmul.f32 %v92, %v155
    %v188 = vmul.f32 %v97, %v143
    %v189 = vmul.f32 %v97, %v147
    %v190 = vmul.f32 %v97, %v151
    %v191 = vmul.f32 %v97, %v155
    %v192 = vmul.f32 %v102, %v143
    %v193 = vmul.f32 %v102, %v147
    %v194 = vmul.f32 %v102, %v151
    %v195 = vmul.f32 %v102, %v155
    %v196 = vmul.f32 %v107, %v143
    %v197 = vmul.f32 %v107, %v147
    %v198 = vmul.f32 %v107, %v151
    %v199 = vmul.f32 %v107, %v155
    %v200 = vmul.f32 %v112, %v143
    %v201 = vmul.f32 %v112, %v147
    %v202 = vmul.f32 %v112, %v151
    %v203 = vmul.f32 %v112, %v155
    %v204 = vmul.f32 %v117, %v143
    %v205 = vmul.f32 %v117, %v147
    %v206 = vmul.f32 %v117, %v151
    %v207 = vmul.f32 %v117, %v155
    %v208 = vmul.f32 %v122, %v143
    %v209 = vmul.f32 %v122, %v147
    %v210 = vmul.f32 %v122, %v151
    %v211 = vmul.f32 %v122, %v155
    %v212 = vmul.f32 %v127, %v143
    %v213 = vmul.f32 %v127, %v147
    %v214 = vmul.f32 %v127, %v151
    %v215 = vmul.f32 %v127, %v155
    %v216 = vmul.f32 %v132, %v143
    %v217 = vmul.f32 %v132, %v147
    %v218 = vmul.f32 %v132, %v151
    %v219 = vmul.f32 %v132, %v155
    %v220 = vmul.f32 %v137, %v143
    %v221 = vmul.f32 %v137, %v147
    %v222 = vmul.f32 %v137, %v151
    %v223 = vmul.f32 %v137, %v155
    %s224 = scalar_lea.vmem %s1, 1
    %v225 = vld [vmem:[%s224] ss:$2 sm:$0xf]
    %226 = vset.pattern.permute.xlu0 1
    %227 = vperm.xlu0 %226, %v42
    %v228 = vpop.permute.xlu0 %227
    %230 = vset.pattern.permute.xlu0 1
    %231 = vperm.xlu0 %230, %v43
    %v232 = vpop.permute.xlu0 %231
    %234 = vset.pattern.permute.xlu0 1
    %235 = vperm.xlu0 %234, %v44
    %v236 = vpop.permute.xlu0 %235
    %238 = vset.pattern.permute.xlu0 1
    %239 = vperm.xlu0 %238, %v45
    %v240 = vpop.permute.xlu0 %239
    %242 = vset.pattern.permute.xlu0 1
    %243 = vperm.xlu0 %242, %v46
    %v244 = vpop.permute.xlu0 %243
    %246 = vset.pattern.permute.xlu0 1
    %247 = vperm.xlu0 %246, %v47
    %v248 = vpop.permute.xlu0 %247
    %250 = vset.pattern.permute.xlu0 1
    %251 = vperm.xlu0 %250, %v48
    %v252 = vpop.permute.xlu0 %251
    %254 = vset.pattern.permute.xlu0 1
    %255 = vperm.xlu0 %254, %v49
    %v256 = vpop.permute.xlu0 %255
    %258 = vset.pattern.permute.xlu0 1
    %259 = vperm.xlu0 %258, %v50
    %v260 = vpop.permute.xlu0 %259
    %262 = vset.pattern.permute.xlu0 1
    %263 = vperm.xlu0 %262, %v51
    %v264 = vpop.permute.xlu0 %263
    %266 = vset.pattern.permute.xlu0 1
    %267 = vperm.xlu0 %266, %v52
    %v268 = vpop.permute.xlu0 %267
    %270 = vset.pattern.permute.xlu0 1
    %271 = vperm.xlu0 %270, %v53
    %v272 = vpop.permute.xlu0 %271
    %274 = vset.pattern.permute.xlu0 1
    %275 = vperm.xlu0 %274, %v54
    %v276 = vpop.permute.xlu0 %275
    %278 = vset.pattern.permute.xlu0 1
    %279 = vperm.xlu0 %278, %v55
    %v280 = vpop.permute.xlu0 %279
    %282 = vset.pattern.permute.xlu0 1
    %283 = vperm.xlu0 %282, %v56
    %v284 = vpop.permute.xlu0 %283
    %286 = vset.pattern.permute.xlu0 1
    %287 = vperm.xlu0 %286, %v57
    %v288 = vpop.permute.xlu0 %287
    %v291 = vlaneseq
    %v292 = vshrl.u32 %v291, 7
    %v293 = vsub.s32 0, %v292
    %v294 = vrot.slane %v225, %v293
    %v295 = vlaneseq
    %v296 = vshrl.u32 %v295, 7
    %v297 = vsub.s32 1, %v296
    %v298 = vrot.slane %v225, %v297
    %v299 = vlaneseq
    %v300 = vshrl.u32 %v299, 7
    %v301 = vsub.s32 2, %v300
    %v302 = vrot.slane %v225, %v301
    %v303 = vlaneseq
    %v304 = vshrl.u32 %v303, 7
    %v305 = vsub.s32 3, %v304
    %v306 = vrot.slane %v225, %v305
    %v311 = vmul.f32 %v228, %v294
    %v312 = vmul.f32 %v228, %v298
    %v313 = vmul.f32 %v228, %v302
    %v314 = vmul.f32 %v228, %v306
    %v315 = vmul.f32 %v232, %v294
    %v316 = vmul.f32 %v232, %v298
    %v317 = vmul.f32 %v232, %v302
    %v318 = vmul.f32 %v232, %v306
    %v319 = vmul.f32 %v236, %v294
    %v320 = vmul.f32 %v236, %v298
    %v321 = vmul.f32 %v236, %v302
    %v322 = vmul.f32 %v236, %v306
    %v323 = vmul.f32 %v240, %v294
    %v324 = vmul.f32 %v240, %v298
    %v325 = vmul.f32 %v240, %v302
    %v326 = vmul.f32 %v240, %v306
    %v327 = vmul.f32 %v244, %v294
    %v328 = vmul.f32 %v244, %v298
    %v329 = vmul.f32 %v244, %v302
    %v330 = vmul.f32 %v244, %v306
    %v331 = vmul.f32 %v248, %v294
    %v332 = vmul.f32 %v248, %v298
    %v333 = vmul.f32 %v248, %v302
    %v334 = vmul.f32 %v248, %v306
    %v335 = vmul.f32 %v252, %v294
    %v336 = vmul.f32 %v252, %v298
    %v337 = vmul.f32 %v252, %v302
    %v338 = vmul.f32 %v252, %v306
    %v339 = vmul.f32 %v256, %v294
    %v340 = vmul.f32 %v256, %v298
    %v341 = vmul.f32 %v256, %v302
    %v342 = vmul.f32 %v256, %v306
    %v343 = vmul.f32 %v260, %v294
    %v344 = vmul.f32 %v260, %v298
    %v345 = vmul.f32 %v260, %v302
    %v346 = vmul.f32 %v260, %v306
    %v347 = vmul.f32 %v264, %v294
    %v348 = vmul.f32 %v264, %v298
    %v349 = vmul.f32 %v264, %v302
    %v350 = vmul.f32 %v264, %v306
    %v351 = vmul.f32 %v268, %v294
    %v352 = vmul.f32 %v268, %v298
    %v353 = vmul.f32 %v268, %v302
    %v354 = vmul.f32 %v268, %v306
    %v355 = vmul.f32 %v272, %v294
    %v356 = vmul.f32 %v272, %v298
    %v357 = vmul.f32 %v272, %v302
    %v358 = vmul.f32 %v272, %v306
    %v359 = vmul.f32 %v276, %v294
    %v360 = vmul.f32 %v276, %v298
    %v361 = vmul.f32 %v276, %v302
    %v362 = vmul.f32 %v276, %v306
    %v363 = vmul.f32 %v280, %v294
    %v364 = vmul.f32 %v280, %v298
    %v365 = vmul.f32 %v280, %v302
    %v366 = vmul.f32 %v280, %v306
    %v367 = vmul.f32 %v284, %v294
    %v368 = vmul.f32 %v284, %v298
    %v369 = vmul.f32 %v284, %v302
    %v370 = vmul.f32 %v284, %v306
    %v371 = vmul.f32 %v288, %v294
    %v372 = vmul.f32 %v288, %v298
    %v373 = vmul.f32 %v288, %v302
    %v374 = vmul.f32 %v288, %v306
    %v375 = vadd.f32 %v160, %v311
    %v376 = vadd.f32 %v161, %v312
    %v377 = vadd.f32 %v162, %v313
    %v378 = vadd.f32 %v163, %v314
    %v379 = vadd.f32 %v164, %v315
    %v380 = vadd.f32 %v165, %v316
    %v381 = vadd.f32 %v166, %v317
    %v382 = vadd.f32 %v167, %v318
    %v383 = vadd.f32 %v168, %v319
    %v384 = vadd.f32 %v169, %v320
    %v385 = vadd.f32 %v170, %v321
    %v386 = vadd.f32 %v171, %v322
    %v387 = vadd.f32 %v172, %v323
    %v388 = vadd.f32 %v173, %v324
    %v389 = vadd.f32 %v174, %v325
    %v390 = vadd.f32 %v175, %v326
    %v391 = vadd.f32 %v176, %v327
    %v392 = vadd.f32 %v177, %v328
    %v393 = vadd.f32 %v178, %v329
    %v394 = vadd.f32 %v179, %v330
    %v395 = vadd.f32 %v180, %v331
    %v396 = vadd.f32 %v181, %v332
    %v397 = vadd.f32 %v182, %v333
    %v398 = vadd.f32 %v183, %v334
    %v399 = vadd.f32 %v184, %v335
    %v400 = vadd.f32 %v185, %v336
    %v401 = vadd.f32 %v186, %v337
    %v402 = vadd.f32 %v187, %v338
    %v403 = vadd.f32 %v188, %v339
    %v404 = vadd.f32 %v189, %v340
    %v405 = vadd.f32 %v190, %v341
    %v406 = vadd.f32 %v191, %v342
    %v407 = vadd.f32 %v192, %v343
    %v408 = vadd.f32 %v193, %v344
    %v409 = vadd.f32 %v194, %v345
    %v410 = vadd.f32 %v195, %v346
    %v411 = vadd.f32 %v196, %v347
    %v412 = vadd.f32 %v197, %v348
    %v413 = vadd.f32 %v198, %v349
    %v414 = vadd.f32 %v199, %v350
    %v415 = vadd.f32 %v200, %v351
    %v416 = vadd.f32 %v201, %v352
    %v417 = vadd.f32 %v202, %v353
    %v418 = vadd.f32 %v203, %v354
    %v419 = vadd.f32 %v204, %v355
    %v420 = vadd.f32 %v205, %v356
    %v421 = vadd.f32 %v206, %v357
    %v422 = vadd.f32 %v207, %v358
    %v423 = vadd.f32 %v208, %v359
    %v424 = vadd.f32 %v209, %v360
    %v425 = vadd.f32 %v210, %v361
    %v426 = vadd.f32 %v211, %v362
    %v427 = vadd.f32 %v212, %v363
    %v428 = vadd.f32 %v213, %v364
    %v429 = vadd.f32 %v214, %v365
    %v430 = vadd.f32 %v215, %v366
    %v431 = vadd.f32 %v216, %v367
    %v432 = vadd.f32 %v217, %v368
    %v433 = vadd.f32 %v218, %v369
    %v434 = vadd.f32 %v219, %v370
    %v435 = vadd.f32 %v220, %v371
    %v436 = vadd.f32 %v221, %v372
    %v437 = vadd.f32 %v222, %v373
    %v438 = vadd.f32 %v223, %v374
    %v439 = vld [vmem:[%s2] sm:$0xf]
    %v441 = vlaneseq
    %v442 = vshrl.u32 %v441, 7
    %v443 = vsub.s32 0, %v442
    %v444 = vrot.slane %v439, %v443
    %v445 = vlaneseq
    %v446 = vshrl.u32 %v445, 7
    %v447 = vsub.s32 1, %v446
    %v448 = vrot.slane %v439, %v447
    %v449 = vlaneseq
    %v450 = vshrl.u32 %v449, 7
    %v451 = vsub.s32 2, %v450
    %v452 = vrot.slane %v439, %v451
    %v453 = vlaneseq
    %v454 = vshrl.u32 %v453, 7
    %v455 = vsub.s32 3, %v454
    %v456 = vrot.slane %v439, %v455
    %v461 = vadd.f32 %v375, %v444
    %v462 = vadd.f32 %v376, %v448
    %v463 = vadd.f32 %v377, %v452
    %v464 = vadd.f32 %v378, %v456
    %v465 = vadd.f32 %v379, %v444
    %v466 = vadd.f32 %v380, %v448
    %v467 = vadd.f32 %v381, %v452
    %v468 = vadd.f32 %v382, %v456
    %v469 = vadd.f32 %v383, %v444
    %v470 = vadd.f32 %v384, %v448
    %v471 = vadd.f32 %v385, %v452
    %v472 = vadd.f32 %v386, %v456
    %v473 = vadd.f32 %v387, %v444
    %v474 = vadd.f32 %v388, %v448
    %v475 = vadd.f32 %v389, %v452
    %v476 = vadd.f32 %v390, %v456
    %v477 = vadd.f32 %v391, %v444
    %v478 = vadd.f32 %v392, %v448
    %v479 = vadd.f32 %v393, %v452
    %v480 = vadd.f32 %v394, %v456
    %v481 = vadd.f32 %v395, %v444
    %v482 = vadd.f32 %v396, %v448
    %v483 = vadd.f32 %v397, %v452
    %v484 = vadd.f32 %v398, %v456
    %v485 = vadd.f32 %v399, %v444
    %v486 = vadd.f32 %v400, %v448
    %v487 = vadd.f32 %v401, %v452
    %v488 = vadd.f32 %v402, %v456
    %v489 = vadd.f32 %v403, %v444
    %v490 = vadd.f32 %v404, %v448
    %v491 = vadd.f32 %v405, %v452
    %v492 = vadd.f32 %v406, %v456
    %v493 = vadd.f32 %v407, %v444
    %v494 = vadd.f32 %v408, %v448
    %v495 = vadd.f32 %v409, %v452
    %v496 = vadd.f32 %v410, %v456
    %v497 = vadd.f32 %v411, %v444
    %v498 = vadd.f32 %v412, %v448
    %v499 = vadd.f32 %v413, %v452
    %v500 = vadd.f32 %v414, %v456
    %v501 = vadd.f32 %v415, %v444
    %v502 = vadd.f32 %v416, %v448
    %v503 = vadd.f32 %v417, %v452
    %v504 = vadd.f32 %v418, %v456
    %v505 = vadd.f32 %v419, %v444
    %v506 = vadd.f32 %v420, %v448
    %v507 = vadd.f32 %v421, %v452
    %v508 = vadd.f32 %v422, %v456
    %v509 = vadd.f32 %v423, %v444
    %v510 = vadd.f32 %v424, %v448
    %v511 = vadd.f32 %v425, %v452
    %v512 = vadd.f32 %v426, %v456
    %v513 = vadd.f32 %v427, %v444
    %v514 = vadd.f32 %v428, %v448
    %v515 = vadd.f32 %v429, %v452
    %v516 = vadd.f32 %v430, %v456
    %v517 = vadd.f32 %v431, %v444
    %v518 = vadd.f32 %v432, %v448
    %v519 = vadd.f32 %v433, %v452
    %v520 = vadd.f32 %v434, %v456
    %v521 = vadd.f32 %v435, %v444
    %v522 = vadd.f32 %v436, %v448
    %v523 = vadd.f32 %v437, %v452
    %v524 = vadd.f32 %v438, %v456
    %vm525 = vcmp.gt.f32.partialorder %v461, 0.0
    %vm526 = vcmp.gt.f32.partialorder %v462, 0.0
    %vm527 = vcmp.gt.f32.partialorder %v463, 0.0
    %vm528 = vcmp.gt.f32.partialorder %v464, 0.0
    %vm529 = vcmp.gt.f32.partialorder %v465, 0.0
    %vm530 = vcmp.gt.f32.partialorder %v466, 0.0
    %vm531 = vcmp.gt.f32.partialorder %v467, 0.0
    %vm532 = vcmp.gt.f32.partialorder %v468, 0.0
    %vm533 = vcmp.gt.f32.partialorder %v469, 0.0
    %vm534 = vcmp.gt.f32.partialorder %v470, 0.0
    %vm535 = vcmp.gt.f32.partialorder %v471, 0.0
    %vm536 = vcmp.gt.f32.partialorder %v472, 0.0
    %vm537 = vcmp.gt.f32.partialorder %v473, 0.0
    %vm538 = vcmp.gt.f32.partialorder %v474, 0.0
    %vm539 = vcmp.gt.f32.partialorder %v475, 0.0
    %vm540 = vcmp.gt.f32.partialorder %v476, 0.0
    %vm541 = vcmp.gt.f32.partialorder %v477, 0.0
    %vm542 = vcmp.gt.f32.partialorder %v478, 0.0
    %vm543 = vcmp.gt.f32.partialorder %v479, 0.0
    %vm544 = vcmp.gt.f32.partialorder %v480, 0.0
    %vm545 = vcmp.gt.f32.partialorder %v481, 0.0
    %vm546 = vcmp.gt.f32.partialorder %v482, 0.0
    %vm547 = vcmp.gt.f32.partialorder %v483, 0.0
    %vm548 = vcmp.gt.f32.partialorder %v484, 0.0
    %vm549 = vcmp.gt.f32.partialorder %v485, 0.0
    %vm550 = vcmp.gt.f32.partialorder %v486, 0.0
    %vm551 = vcmp.gt.f32.partialorder %v487, 0.0
    %vm552 = vcmp.gt.f32.partialorder %v488, 0.0
    %vm553 = vcmp.gt.f32.partialorder %v489, 0.0
    %vm554 = vcmp.gt.f32.partialorder %v490, 0.0
    %vm555 = vcmp.gt.f32.partialorder %v491, 0.0
    %vm556 = vcmp.gt.f32.partialorder %v492, 0.0
    %vm557 = vcmp.gt.f32.partialorder %v493, 0.0
    %vm558 = vcmp.gt.f32.partialorder %v494, 0.0
    %vm559 = vcmp.gt.f32.partialorder %v495, 0.0
    %vm560 = vcmp.gt.f32.partialorder %v496, 0.0
    %vm561 = vcmp.gt.f32.partialorder %v497, 0.0
    %vm562 = vcmp.gt.f32.partialorder %v498, 0.0
    %vm563 = vcmp.gt.f32.partialorder %v499, 0.0
    %vm564 = vcmp.gt.f32.partialorder %v500, 0.0
    %vm565 = vcmp.gt.f32.partialorder %v501, 0.0
    %vm566 = vcmp.gt.f32.partialorder %v502, 0.0
    %vm567 = vcmp.gt.f32.partialorder %v503, 0.0
    %vm568 = vcmp.gt.f32.partialorder %v504, 0.0
    %vm569 = vcmp.gt.f32.partialorder %v505, 0.0
    %vm570 = vcmp.gt.f32.partialorder %v506, 0.0
    %vm571 = vcmp.gt.f32.partialorder %v507, 0.0
    %vm572 = vcmp.gt.f32.partialorder %v508, 0.0
    %vm573 = vcmp.gt.f32.partialorder %v509, 0.0
    %vm574 = vcmp.gt.f32.partialorder %v510, 0.0
    %vm575 = vcmp.gt.f32.partialorder %v511, 0.0
    %vm576 = vcmp.gt.f32.partialorder %v512, 0.0
    %vm577 = vcmp.gt.f32.partialorder %v513, 0.0
    %vm578 = vcmp.gt.f32.partialorder %v514, 0.0
    %vm579 = vcmp.gt.f32.partialorder %v515, 0.0
    %vm580 = vcmp.gt.f32.partialorder %v516, 0.0
    %vm581 = vcmp.gt.f32.partialorder %v517, 0.0
    %vm582 = vcmp.gt.f32.partialorder %v518, 0.0
    %vm583 = vcmp.gt.f32.partialorder %v519, 0.0
    %vm584 = vcmp.gt.f32.partialorder %v520, 0.0
    %vm585 = vcmp.gt.f32.partialorder %v521, 0.0
    %vm586 = vcmp.gt.f32.partialorder %v522, 0.0
    %vm587 = vcmp.gt.f32.partialorder %v523, 0.0
    %vm588 = vcmp.gt.f32.partialorder %v524, 0.0
    %v589 = vmul.f32 %v461, 0.2
    %v590 = vmul.f32 %v462, 0.2
    %v591 = vmul.f32 %v463, 0.2
    %v592 = vmul.f32 %v464, 0.2
    %v593 = vmul.f32 %v465, 0.2
    %v594 = vmul.f32 %v466, 0.2
    %v595 = vmul.f32 %v467, 0.2
    %v596 = vmul.f32 %v468, 0.2
    %v597 = vmul.f32 %v469, 0.2
    %v598 = vmul.f32 %v470, 0.2
    %v599 = vmul.f32 %v471, 0.2
    %v600 = vmul.f32 %v472, 0.2
    %v601 = vmul.f32 %v473, 0.2
    %v602 = vmul.f32 %v474, 0.2
    %v603 = vmul.f32 %v475, 0.2
    %v604 = vmul.f32 %v476, 0.2
    %v605 = vmul.f32 %v477, 0.2
    %v606 = vmul.f32 %v478, 0.2
    %v607 = vmul.f32 %v479, 0.2
    %v608 = vmul.f32 %v480, 0.2
    %v609 = vmul.f32 %v481, 0.2
    %v610 = vmul.f32 %v482, 0.2
    %v611 = vmul.f32 %v483, 0.2
    %v612 = vmul.f32 %v484, 0.2
    %v613 = vmul.f32 %v485, 0.2
    %v614 = vmul.f32 %v486, 0.2
    %v615 = vmul.f32 %v487, 0.2
    %v616 = vmul.f32 %v488, 0.2
    %v617 = vmul.f32 %v489, 0.2
    %v618 = vmul.f32 %v490, 0.2
    %v619 = vmul.f32 %v491, 0.2
    %v620 = vmul.f32 %v492, 0.2
    %v621 = vmul.f32 %v493, 0.2
    %v622 = vmul.f32 %v494, 0.2
    %v623 = vmul.f32 %v495, 0.2
    %v624 = vmul.f32 %v496, 0.2
    %v625 = vmul.f32 %v497, 0.2
    %v626 = vmul.f32 %v498, 0.2
    %v627 = vmul.f32 %v499, 0.2
    %v628 = vmul.f32 %v500, 0.2
    %v629 = vmul.f32 %v501, 0.2
    %v630 = vmul.f32 %v502, 0.2
    %v631 = vmul.f32 %v503, 0.2
    %v632 = vmul.f32 %v504, 0.2
    %v633 = vmul.f32 %v505, 0.2
    %v634 = vmul.f32 %v506, 0.2
    %v635 = vmul.f32 %v507, 0.2
    %v636 = vmul.f32 %v508, 0.2
    %v637 = vmul.f32 %v509, 0.2
    %v638 = vmul.f32 %v510, 0.2
    %v639 = vmul.f32 %v511, 0.2
    %v640 = vmul.f32 %v512, 0.2
    %v641 = vmul.f32 %v513, 0.2
    %v642 = vmul.f32 %v514, 0.2
    %v643 = vmul.f32 %v515, 0.2
    %v644 = vmul.f32 %v516, 0.2
    %v645 = vmul.f32 %v517, 0.2
    %v646 = vmul.f32 %v518, 0.2
    %v647 = vmul.f32 %v519, 0.2
    %v648 = vmul.f32 %v520, 0.2
    %v649 = vmul.f32 %v521, 0.2
    %v650 = vmul.f32 %v522, 0.2
    %v651 = vmul.f32 %v523, 0.2
    %v652 = vmul.f32 %v524, 0.2
    %v653 = vsel %vm525, %v461, %v589
    %v654 = vsel %vm526, %v462, %v590
    %v655 = vsel %vm527, %v463, %v591
    %v656 = vsel %vm528, %v464, %v592
    %v657 = vsel %vm529, %v465, %v593
    %v658 = vsel %vm530, %v466, %v594
    %v659 = vsel %vm531, %v467, %v595
    %v660 = vsel %vm532, %v468, %v596
    %v661 = vsel %vm533, %v469, %v597
    %v662 = vsel %vm534, %v470, %v598
    %v663 = vsel %vm535, %v471, %v599
    %v664 = vsel %vm536, %v472, %v600
    %v665 = vsel %vm537, %v473, %v601
    %v666 = vsel %vm538, %v474, %v602
    %v667 = vsel %vm539, %v475, %v603
    %v668 = vsel %vm540, %v476, %v604
    %v669 = vsel %vm541, %v477, %v605
    %v670 = vsel %vm542, %v478, %v606
    %v671 = vsel %vm543, %v479, %v607
    %v672 = vsel %vm544, %v480, %v608
    %v673 = vsel %vm545, %v481, %v609
    %v674 = vsel %vm546, %v482, %v610
    %v675 = vsel %vm547, %v483, %v611
    %v676 = vsel %vm548, %v484, %v612
    %v677 = vsel %vm549, %v485, %v613
    %v678 = vsel %vm550, %v486, %v614
    %v679 = vsel %vm551, %v487, %v615
    %v680 = vsel %vm552, %v488, %v616
    %v681 = vsel %vm553, %v489, %v617
    %v682 = vsel %vm554, %v490, %v618
    %v683 = vsel %vm555, %v491, %v619
    %v684 = vsel %vm556, %v492, %v620
    %v685 = vsel %vm557, %v493, %v621
    %v686 = vsel %vm558, %v494, %v622
    %v687 = vsel %vm559, %v495, %v623
    %v688 = vsel %vm560, %v496, %v624
    %v689 = vsel %vm561, %v497, %v625
    %v690 = vsel %vm562, %v498, %v626
    %v691 = vsel %vm563, %v499, %v627
    %v692 = vsel %vm564, %v500, %v628
    %v693 = vsel %vm565, %v501, %v629
    %v694 = vsel %vm566, %v502, %v630
    %v695 = vsel %vm567, %v503, %v631
    %v696 = vsel %vm568, %v504, %v632
    %v697 = vsel %vm569, %v505, %v633
    %v698 = vsel %vm570, %v506, %v634
    %v699 = vsel %vm571, %v507, %v635
    %v700 = vsel %vm572, %v508, %v636
    %v701 = vsel %vm573, %v509, %v637
    %v702 = vsel %vm574, %v510, %v638
    %v703 = vsel %vm575, %v511, %v639
    %v704 = vsel %vm576, %v512, %v640
    %v705 = vsel %vm577, %v513, %v641
    %v706 = vsel %vm578, %v514, %v642
    %v707 = vsel %vm579, %v515, %v643
    %v708 = vsel %vm580, %v516, %v644
    %v709 = vsel %vm581, %v517, %v645
    %v710 = vsel %vm582, %v518, %v646
    %v711 = vsel %vm583, %v519, %v647
    %v712 = vsel %vm584, %v520, %v648
    %v713 = vsel %vm585, %v521, %v649
    %v714 = vsel %vm586, %v522, %v650
    %v715 = vsel %vm587, %v523, %v651
    %v716 = vsel %vm588, %v524, %v652
    %v717 = vld [vmem:[#allocation3] sm:$0xff]
    %v718 = vld [vmem:[#allocation3 + $0x8] sm:$0xff]
    %v719 = vld [vmem:[#allocation3 + $0x10] sm:$0xff]
    %v720 = vld [vmem:[#allocation3 + $0x18] sm:$0xff]
    %v721 = vld [vmem:[#allocation3 + $0x20] sm:$0xff]
    %v722 = vld [vmem:[#allocation3 + $0x28] sm:$0xff]
    %v723 = vld [vmem:[#allocation3 + $0x30] sm:$0xff]
    %v724 = vld [vmem:[#allocation3 + $0x38] sm:$0xff]
    %v725 = vld [vmem:[#allocation3 + $0x40] sm:$0xff]
    %v726 = vld [vmem:[#allocation3 + $0x48] sm:$0xff]
    %v727 = vld [vmem:[#allocation3 + $0x50] sm:$0xff]
    %v728 = vld [vmem:[#allocation3 + $0x58] sm:$0xff]
    %v729 = vld [vmem:[#allocation3 + $0x60] sm:$0xff]
    %v730 = vld [vmem:[#allocation3 + $0x68] sm:$0xff]
    %v731 = vld [vmem:[#allocation3 + $0x70] sm:$0xff]
    %v732 = vld [vmem:[#allocation3 + $0x78] sm:$0xff]
    %v733 = vld [vmem:[#allocation3 + $0x80] sm:$0xff]
    %v734 = vld [vmem:[#allocation3 + $0x88] sm:$0xff]
    %v735 = vld [vmem:[#allocation3 + $0x90] sm:$0xff]
    %v736 = vld [vmem:[#allocation3 + $0x98] sm:$0xff]
    %v737 = vld [vmem:[#allocation3 + $0xa0] sm:$0xff]
    %v738 = vld [vmem:[#allocation3 + $0xa8] sm:$0xff]
    %v739 = vld [vmem:[#allocation3 + $0xb0] sm:$0xff]
    %v740 = vld [vmem:[#allocation3 + $0xb8] sm:$0xff]
    %v741 = vld [vmem:[#allocation3 + $0xc0] sm:$0xff]
    %v742 = vld [vmem:[#allocation3 + $0xc8] sm:$0xff]
    %v743 = vld [vmem:[#allocation3 + $0xd0] sm:$0xff]
    %v744 = vld [vmem:[#allocation3 + $0xd8] sm:$0xff]
    %v745 = vld [vmem:[#allocation3 + $0xe0] sm:$0xff]
    %v746 = vld [vmem:[#allocation3 + $0xe8] sm:$0xff]
    %v747 = vld [vmem:[#allocation3 + $0xf0] sm:$0xff]
    %v748 = vld [vmem:[#allocation3 + $0xf8] sm:$0xff]
    %v749 = vld [vmem:[#allocation3 + $0x100] sm:$0xff]
    %v750 = vld [vmem:[#allocation3 + $0x108] sm:$0xff]
    %v751 = vld [vmem:[#allocation3 + $0x110] sm:$0xff]
    %v752 = vld [vmem:[#allocation3 + $0x118] sm:$0xff]
    %v753 = vld [vmem:[#allocation3 + $0x120] sm:$0xff]
    %v754 = vld [vmem:[#allocation3 + $0x128] sm:$0xff]
    %v755 = vld [vmem:[#allocation3 + $0x130] sm:$0xff]
    %v756 = vld [vmem:[#allocation3 + $0x138] sm:$0xff]
    %v757 = vld [vmem:[#allocation3 + $0x140] sm:$0xff]
    %v758 = vld [vmem:[#allocation3 + $0x148] sm:$0xff]
    %v759 = vld [vmem:[#allocation3 + $0x150] sm:$0xff]
    %v760 = vld [vmem:[#allocation3 + $0x158] sm:$0xff]
    %v761 = vld [vmem:[#allocation3 + $0x160] sm:$0xff]
    %v762 = vld [vmem:[#allocation3 + $0x168] sm:$0xff]
    %v763 = vld [vmem:[#allocation3 + $0x170] sm:$0xff]
    %v764 = vld [vmem:[#allocation3 + $0x178] sm:$0xff]
    %v765 = vld [vmem:[#allocation3 + $0x180] sm:$0xff]
    %v766 = vld [vmem:[#allocation3 + $0x188] sm:$0xff]
    %v767 = vld [vmem:[#allocation3 + $0x190] sm:$0xff]
    %v768 = vld [vmem:[#allocation3 + $0x198] sm:$0xff]
    %v769 = vld [vmem:[#allocation3 + $0x1a0] sm:$0xff]
    %v770 = vld [vmem:[#allocation3 + $0x1a8] sm:$0xff]
    %v771 = vld [vmem:[#allocation3 + $0x1b0] sm:$0xff]
    %v772 = vld [vmem:[#allocation3 + $0x1b8] sm:$0xff]
    %v773 = vld [vmem:[#allocation3 + $0x1c0] sm:$0xff]
    %v774 = vld [vmem:[#allocation3 + $0x1c8] sm:$0xff]
    %v775 = vld [vmem:[#allocation3 + $0x1d0] sm:$0xff]
    %v776 = vld [vmem:[#allocation3 + $0x1d8] sm:$0xff]
    %v777 = vld [vmem:[#allocation3 + $0x1e0] sm:$0xff]
    %v778 = vld [vmem:[#allocation3 + $0x1e8] sm:$0xff]
    %v779 = vld [vmem:[#allocation3 + $0x1f0] sm:$0xff]
    %v780 = vld [vmem:[#allocation3 + $0x1f8] sm:$0xff]
    %v781 = vld [vmem:[#allocation3 + $0x200] sm:$0xff]
    %v782 = vld [vmem:[#allocation3 + $0x208] sm:$0xff]
    %v783 = vld [vmem:[#allocation3 + $0x210] sm:$0xff]
    %v784 = vld [vmem:[#allocation3 + $0x218] sm:$0xff]
    %v785 = vld [vmem:[#allocation3 + $0x220] sm:$0xff]
    %v786 = vld [vmem:[#allocation3 + $0x228] sm:$0xff]
    %v787 = vld [vmem:[#allocation3 + $0x230] sm:$0xff]
    %v788 = vld [vmem:[#allocation3 + $0x238] sm:$0xff]
    %v789 = vld [vmem:[#allocation3 + $0x240] sm:$0xff]
    %v790 = vld [vmem:[#allocation3 + $0x248] sm:$0xff]
    %v791 = vld [vmem:[#allocation3 + $0x250] sm:$0xff]
    %v792 = vld [vmem:[#allocation3 + $0x258] sm:$0xff]
    %v793 = vld [vmem:[#allocation3 + $0x260] sm:$0xff]
    %v794 = vld [vmem:[#allocation3 + $0x268] sm:$0xff]
    %v795 = vld [vmem:[#allocation3 + $0x270] sm:$0xff]
    %v796 = vld [vmem:[#allocation3 + $0x278] sm:$0xff]
    %v797 = vld [vmem:[#allocation3 + $0x280] sm:$0xff]
    %v798 = vld [vmem:[#allocation3 + $0x288] sm:$0xff]
    %v799 = vld [vmem:[#allocation3 + $0x290] sm:$0xff]
    %v800 = vld [vmem:[#allocation3 + $0x298] sm:$0xff]
    %v801 = vld [vmem:[#allocation3 + $0x2a0] sm:$0xff]
    %v802 = vld [vmem:[#allocation3 + $0x2a8] sm:$0xff]
    %v803 = vld [vmem:[#allocation3 + $0x2b0] sm:$0xff]
    %v804 = vld [vmem:[#allocation3 + $0x2b8] sm:$0xff]
    %v805 = vld [vmem:[#allocation3 + $0x2c0] sm:$0xff]
    %v806 = vld [vmem:[#allocation3 + $0x2c8] sm:$0xff]
    %v807 = vld [vmem:[#allocation3 + $0x2d0] sm:$0xff]
    %v808 = vld [vmem:[#allocation3 + $0x2d8] sm:$0xff]
    %v809 = vld [vmem:[#allocation3 + $0x2e0] sm:$0xff]
    %v810 = vld [vmem:[#allocation3 + $0x2e8] sm:$0xff]
    %v811 = vld [vmem:[#allocation3 + $0x2f0] sm:$0xff]
    %v812 = vld [vmem:[#allocation3 + $0x2f8] sm:$0xff]
    %v813 = vld [vmem:[#allocation3 + $0x300] sm:$0xff]
    %v814 = vld [vmem:[#allocation3 + $0x308] sm:$0xff]
    %v815 = vld [vmem:[#allocation3 + $0x310] sm:$0xff]
    %v816 = vld [vmem:[#allocation3 + $0x318] sm:$0xff]
    %v817 = vld [vmem:[#allocation3 + $0x320] sm:$0xff]
    %v818 = vld [vmem:[#allocation3 + $0x328] sm:$0xff]
    %v819 = vld [vmem:[#allocation3 + $0x330] sm:$0xff]
    %v820 = vld [vmem:[#allocation3 + $0x338] sm:$0xff]
    %v821 = vld [vmem:[#allocation3 + $0x340] sm:$0xff]
    %v822 = vld [vmem:[#allocation3 + $0x348] sm:$0xff]
    %v823 = vld [vmem:[#allocation3 + $0x350] sm:$0xff]
    %v824 = vld [vmem:[#allocation3 + $0x358] sm:$0xff]
    %v825 = vld [vmem:[#allocation3 + $0x360] sm:$0xff]
    %v826 = vld [vmem:[#allocation3 + $0x368] sm:$0xff]
    %v827 = vld [vmem:[#allocation3 + $0x370] sm:$0xff]
    %v828 = vld [vmem:[#allocation3 + $0x378] sm:$0xff]
    %v829 = vld [vmem:[#allocation3 + $0x380] sm:$0xff]
    %v830 = vld [vmem:[#allocation3 + $0x388] sm:$0xff]
    %v831 = vld [vmem:[#allocation3 + $0x390] sm:$0xff]
    %v832 = vld [vmem:[#allocation3 + $0x398] sm:$0xff]
    %v833 = vld [vmem:[#allocation3 + $0x3a0] sm:$0xff]
    %v834 = vld [vmem:[#allocation3 + $0x3a8] sm:$0xff]
    %v835 = vld [vmem:[#allocation3 + $0x3b0] sm:$0xff]
    %v836 = vld [vmem:[#allocation3 + $0x3b8] sm:$0xff]
    %v837 = vld [vmem:[#allocation3 + $0x3c0] sm:$0xff]
    %v838 = vld [vmem:[#allocation3 + $0x3c8] sm:$0xff]
    %v839 = vld [vmem:[#allocation3 + $0x3d0] sm:$0xff]
    %v840 = vld [vmem:[#allocation3 + $0x3d8] sm:$0xff]
    %v841 = vld [vmem:[#allocation3 + $0x3e0] sm:$0xff]
    %v842 = vld [vmem:[#allocation3 + $0x3e8] sm:$0xff]
    %v843 = vld [vmem:[#allocation3 + $0x3f0] sm:$0xff]
    %v844 = vld [vmem:[#allocation3 + $0x3f8] sm:$0xff]
    %v845 = vld [vmem:[%s4] sm:$0x3]
    %v847 = vlaneseq
    %v848 = vshrl.u32 %v847, 7
    %v849 = vsub.s32 0, %v848
    %v850 = vrot.slane %v845, %v849
    %v851 = vlaneseq
    %v852 = vshrl.u32 %v851, 7
    %v853 = vsub.s32 1, %v852
    %v854 = vrot.slane %v845, %v853
    %857 = vmatprep.subr.mxu0 %v718
    %858 = vmatpush1.msra.mxu0 %v717
    %859 = vmatprep.subr.mxu0 %v720
    %860 = vmatpush1.msra.mxu0 %v719
    %861 = vmatprep.subr.mxu0 %v722
    %862 = vmatpush1.msra.mxu0 %v721
    %863 = vmatprep.subr.mxu0 %v724
    %864 = vmatpush1.msra.mxu0 %v723
    %865 = vmatprep.subr.mxu0 %v726
    %866 = vmatpush1.msra.mxu0 %v725
    %867 = vmatprep.subr.mxu0 %v728
    %868 = vmatpush1.msra.mxu0 %v727
    %869 = vmatprep.subr.mxu0 %v730
    %870 = vmatpush1.msra.mxu0 %v729
    %871 = vmatprep.subr.mxu0 %v732
    %872 = vmatpush1.msra.mxu0 %v731
    %873 = vmatprep.subr.mxu0 %v734
    %874 = vmatpush1.msra.mxu0 %v733
    %875 = vmatprep.subr.mxu0 %v736
    %876 = vmatpush1.msra.mxu0 %v735
    %877 = vmatprep.subr.mxu0 %v738
    %878 = vmatpush1.msra.mxu0 %v737
    %879 = vmatprep.subr.mxu0 %v740
    %880 = vmatpush1.msra.mxu0 %v739
    %881 = vmatprep.subr.mxu0 %v742
    %882 = vmatpush1.msra.mxu0 %v741
    %883 = vmatprep.subr.mxu0 %v744
    %884 = vmatpush1.msra.mxu0 %v743
    %885 = vmatprep.subr.mxu0 %v746
    %886 = vmatpush1.msra.mxu0 %v745
    %887 = vmatprep.subr.mxu0 %v748
    %888 = vmatpush1.msra.mxu0 %v747
    %889 = vmatprep.subr.mxu0 %v750
    %890 = vmatpush1.msra.mxu0 %v749
    %891 = vmatprep.subr.mxu0 %v752
    %892 = vmatpush1.msra.mxu0 %v751
    %893 = vmatprep.subr.mxu0 %v754
    %894 = vmatpush1.msra.mxu0 %v753
    %895 = vmatprep.subr.mxu0 %v756
    %896 = vmatpush1.msra.mxu0 %v755
    %897 = vmatprep.subr.mxu0 %v758
    %898 = vmatpush1.msra.mxu0 %v757
    %899 = vmatprep.subr.mxu0 %v760
    %900 = vmatpush1.msra.mxu0 %v759
    %901 = vmatprep.subr.mxu0 %v762
    %902 = vmatpush1.msra.mxu0 %v761
    %903 = vmatprep.subr.mxu0 %v764
    %904 = vmatpush1.msra.mxu0 %v763
    %905 = vmatprep.subr.mxu0 %v766
    %906 = vmatpush1.msra.mxu0 %v765
    %907 = vmatprep.subr.mxu0 %v768
    %908 = vmatpush1.msra.mxu0 %v767
    %909 = vmatprep.subr.mxu0 %v770
    %910 = vmatpush1.msra.mxu0 %v769
    %911 = vmatprep.subr.mxu0 %v772
    %912 = vmatpush1.msra.mxu0 %v771
    %913 = vmatprep.subr.mxu0 %v774
    %914 = vmatpush1.msra.mxu0 %v773
    %915 = vmatprep.subr.mxu0 %v776
    %916 = vmatpush1.msra.mxu0 %v775
    %917 = vmatprep.subr.mxu0 %v778
    %918 = vmatpush1.msra.mxu0 %v777
    %919 = vmatprep.subr.mxu0 %v780
    %920 = vmatpush1.msra.mxu0 %v779
    %921 = vmatprep.mubr.f32.mxu0 %v654
    %922 = vmatmul.mubr.f32.gmra.mrb[0].mxu0 %v653
    %v923 = vpop.f32.mrb[0].mxu0
    %v924 = vadd.f32 %v850, %v923
    %v925 = vpop.f32.mrb[0].mxu0
    %v926 = vadd.f32 %v854, %v925
    %927 = vmatprep.mubr.f32.mxu0 %v658
    %928 = vmatmul.mubr.f32.gmra.mrb[0].mxu0 %v657
    %v929 = vpop.f32.mrb[0].mxu0
    %v930 = vadd.f32 %v850, %v929
    %v931 = vpop.f32.mrb[0].mxu0
    %v932 = vadd.f32 %v854, %v931
    %933 = vmatprep.mubr.f32.mxu0 %v662
    %934 = vmatmul.mubr.f32.gmra.mrb[0].mxu0 %v661
    %v935 = vpop.f32.mrb[0].mxu0
    %v936 = vadd.f32 %v850, %v935
    %v937 = vpop.f32.mrb[0].mxu0
    %v938 = vadd.f32 %v854, %v937
    %939 = vmatprep.mubr.f32.mxu0 %v666
    %940 = vmatmul.mubr.f32.gmra.mrb[0].mxu0 %v665
    %v941 = vpop.f32.mrb[0].mxu0
    %v942 = vadd.f32 %v850, %v941
    %v943 = vpop.f32.mrb[0].mxu0
    %v944 = vadd.f32 %v854, %v943
    %945 = vmatprep.mubr.f32.mxu0 %v670
    %946 = vmatmul.mubr.f32.gmra.mrb[0].mxu0 %v669
    %v947 = vpop.f32.mrb[0].mxu0
    %v948 = vadd.f32 %v850, %v947
    %v949 = vpop.f32.mrb[0].mxu0
    %v950 = vadd.f32 %v854, %v949
    %951 = vmatprep.mubr.f32.mxu0 %v674
    %952 = vmatmul.mubr.f32.gmra.mrb[0].mxu0 %v673
    %v953 = vpop.f32.mrb[0].mxu0
    %v954 = vadd.f32 %v850, %v953
    %v955 = vpop.f32.mrb[0].mxu0
    %v956 = vadd.f32 %v854, %v955
    %957 = vmatprep.mubr.f32.mxu0 %v678
    %958 = vmatmul.mubr.f32.gmra.mrb[0].mxu0 %v677
    %v959 = vpop.f32.mrb[0].mxu0
    %v960 = vadd.f32 %v850, %v959
    %v961 = vpop.f32.mrb[0].mxu0
    %v962 = vadd.f32 %v854, %v961
    %963 = vmatprep.mubr.f32.mxu0 %v682
    %964 = vmatmul.mubr.f32.gmra.mrb[0].mxu0 %v681
    %v965 = vpop.f32.mrb[0].mxu0
    %v966 = vadd.f32 %v850, %v965
    %v967 = vpop.f32.mrb[0].mxu0
    %v968 = vadd.f32 %v854, %v967
    %969 = vmatprep.mubr.f32.mxu0 %v686
    %970 = vmatmul.mubr.f32.gmra.mrb[0].mxu0 %v685
    %v971 = vpop.f32.mrb[0].mxu0
    %v972 = vadd.f32 %v850, %v971
    %v973 = vpop.f32.mrb[0].mxu0
    %v974 = vadd.f32 %v854, %v973
    %975 = vmatprep.mubr.f32.mxu0 %v690
    %976 = vmatmul.mubr.f32.gmra.mrb[0].mxu0 %v689
    %v977 = vpop.f32.mrb[0].mxu0
    %v978 = vadd.f32 %v850, %v977
    %v979 = vpop.f32.mrb[0].mxu0
    %v980 = vadd.f32 %v854, %v979
    %981 = vmatprep.mubr.f32.mxu0 %v694
    %982 = vmatmul.mubr.f32.gmra.mrb[0].mxu0 %v693
    %v983 = vpop.f32.mrb[0].mxu0
    %v984 = vadd.f32 %v850, %v983
    %v985 = vpop.f32.mrb[0].mxu0
    %v986 = vadd.f32 %v854, %v985
    %987 = vmatprep.mubr.f32.mxu0 %v698
    %988 = vmatmul.mubr.f32.gmra.mrb[0].mxu0 %v697
    %v989 = vpop.f32.mrb[0].mxu0
    %v990 = vadd.f32 %v850, %v989
    %v991 = vpop.f32.mrb[0].mxu0
    %v992 = vadd.f32 %v854, %v991
    %993 = vmatprep.mubr.f32.mxu0 %v702
    %994 = vmatmul.mubr.f32.gmra.mrb[0].mxu0 %v701
    %v995 = vpop.f32.mrb[0].mxu0
    %v996 = vadd.f32 %v850, %v995
    %v997 = vpop.f32.mrb[0].mxu0
    %v998 = vadd.f32 %v854, %v997
    %999 = vmatprep.mubr.f32.mxu0 %v706
    %1000 = vmatmul.mubr.f32.gmra.mrb[0].mxu0 %v705
    %v1001 = vpop.f32.mrb[0].mxu0
    %v1002 = vadd.f32 %v850, %v1001
    %v1003 = vpop.f32.mrb[0].mxu0
    %v1004 = vadd.f32 %v854, %v1003
    %1005 = vmatprep.mubr.f32.mxu0 %v710
    %1006 = vmatmul.mubr.f32.gmra.mrb[0].mxu0 %v709
    %v1007 = vpop.f32.mrb[0].mxu0
    %v1008 = vadd.f32 %v850, %v1007
    %v1009 = vpop.f32.mrb[0].mxu0
    %v1010 = vadd.f32 %v854, %v1009
    %1011 = vmatprep.mubr.f32.mxu0 %v714
    %1012 = vmatmul.mubr.f32.gmra.mrb[0].mxu0 %v713
    %v1013 = vpop.f32.mrb[0].mxu0
    %v1014 = vadd.f32 %v850, %v1013
    %v1015 = vpop.f32.mrb[0].mxu0
    %v1016 = vadd.f32 %v854, %v1015
    %1017 = vdwg.mxu0
    %1018 = vmatprep.subr.mxu0 %v782
    %1019 = vmatpush1.msra.mxu0 %v781
    %1020 = vmatprep.subr.mxu0 %v784
    %1021 = vmatpush1.msra.mxu0 %v783
    %1022 = vmatprep.subr.mxu0 %v786
    %1023 = vmatpush1.msra.mxu0 %v785
    %1024 = vmatprep.subr.mxu0 %v788
    %1025 = vmatpush1.msra.mxu0 %v787
    %1026 = vmatprep.subr.mxu0 %v790
    %1027 = vmatpush1.msra.mxu0 %v789
    %1028 = vmatprep.subr.mxu0 %v792
    %1029 = vmatpush1.msra.mxu0 %v791
    %1030 = vmatprep.subr.mxu0 %v794
    %1031 = vmatpush1.msra.mxu0 %v793
    %1032 = vmatprep.subr.mxu0 %v796
    %1033 = vmatpush1.msra.mxu0 %v795
    %1034 = vmatprep.subr.mxu0 %v798
    %1035 = vmatpush1.msra.mxu0 %v797
    %1036 = vmatprep.subr.mxu0 %v800
    %1037 = vmatpush1.msra.mxu0 %v799
    %1038 = vmatprep.subr.mxu0 %v802
    %1039 = vmatpush1.msra.mxu0 %v801
    %1040 = vmatprep.subr.mxu0 %v804
    %1041 = vmatpush1.msra.mxu0 %v803
    %1042 = vmatprep.subr.mxu0 %v806
    %1043 = vmatpush1.msra.mxu0 %v805
    %1044 = vmatprep.subr.mxu0 %v808
    %1045 = vmatpush1.msra.mxu0 %v807
    %1046 = vmatprep.subr.mxu0 %v810
    %1047 = vmatpush1.msra.mxu0 %v809
    %1048 = vmatprep.subr.mxu0 %v812
    %1049 = vmatpush1.msra.mxu0 %v811
    %1050 = vmatprep.subr.mxu0 %v814
    %1051 = vmatpush1.msra.mxu0 %v813
    %1052 = vmatprep.subr.mxu0 %v816
    %1053 = vmatpush1.msra.mxu0 %v815
    %1054 = vmatprep.subr.mxu0 %v818
    %1055 = vmatpush1.msra.mxu0 %v817
    %1056 = vmatprep.subr.mxu0 %v820
    %1057 = vmatpush1.msra.mxu0 %v819
    %1058 = vmatprep.subr.mxu0 %v822
    %1059 = vmatpush1.msra.mxu0 %v821
    %1060 = vmatprep.subr.mxu0 %v824
    %1061 = vmatpush1.msra.mxu0 %v823
    %1062 = vmatprep.subr.mxu0 %v826
    %1063 = vmatpush1.msra.mxu0 %v825
    %1064 = vmatprep.subr.mxu0 %v828
    %1065 = vmatpush1.msra.mxu0 %v827
    %1066 = vmatprep.subr.mxu0 %v830
    %1067 = vmatpush1.msra.mxu0 %v829
    %1068 = vmatprep.subr.mxu0 %v832
    %1069 = vmatpush1.msra.mxu0 %v831
    %1070 = vmatprep.subr.mxu0 %v834
    %1071 = vmatpush1.msra.mxu0 %v833
    %1072 = vmatprep.subr.mxu0 %v836
    %1073 = vmatpush1.msra.mxu0 %v835
    %1074 = vmatprep.subr.mxu0 %v838
    %1075 = vmatpush1.msra.mxu0 %v837
    %1076 = vmatprep.subr.mxu0 %v840
    %1077 = vmatpush1.msra.mxu0 %v839
    %1078 = vmatprep.subr.mxu0 %v842
    %1079 = vmatpush1.msra.mxu0 %v841
    %1080 = vmatprep.subr.mxu0 %v844
    %1081 = vmatpush1.msra.mxu0 %v843
    %1082 = vmatprep.mubr.f32.mxu0 %v656
    %1083 = vmatmul.mubr.f32.gmra.mrb[0].mxu0 %v655
    %v1084 = vpop.f32.mrb[0].mxu0
    %v1085 = vadd.f32 %v924, %v1084
    %v1086 = vpop.f32.mrb[0].mxu0
    %v1087 = vadd.f32 %v926, %v1086
    %1088 = vmatprep.mubr.f32.mxu0 %v660
    %1089 = vmatmul.mubr.f32.gmra.mrb[0].mxu0 %v659
    %v1090 = vpop.f32.mrb[0].mxu0
    %v1091 = vadd.f32 %v930, %v1090
    %v1092 = vpop.f32.mrb[0].mxu0
    %v1093 = vadd.f32 %v932, %v1092
    %1094 = vmatprep.mubr.f32.mxu0 %v664
    %1095 = vmatmul.mubr.f32.gmra.mrb[0].mxu0 %v663
    %v1096 = vpop.f32.mrb[0].mxu0
    %v1097 = vadd.f32 %v936, %v1096
    %v1098 = vpop.f32.mrb[0].mxu0
    %v1099 = vadd.f32 %v938, %v1098
    %1100 = vmatprep.mubr.f32.mxu0 %v668
    %1101 = vmatmul.mubr.f32.gmra.mrb[0].mxu0 %v667
    %v1102 = vpop.f32.mrb[0].mxu0
    %v1103 = vadd.f32 %v942, %v1102
    %v1104 = vpop.f32.mrb[0].mxu0
    %v1105 = vadd.f32 %v944, %v1104
    %1106 = vmatprep.mubr.f32.mxu0 %v672
    %1107 = vmatmul.mubr.f32.gmra.mrb[0].mxu0 %v671
    %v1108 = vpop.f32.mrb[0].mxu0
    %v1109 = vadd.f32 %v948, %v1108
    %v1110 = vpop.f32.mrb[0].mxu0
    %v1111 = vadd.f32 %v950, %v1110
    %1112 = vmatprep.mubr.f32.mxu0 %v676
    %1113 = vmatmul.mubr.f32.gmra.mrb[0].mxu0 %v675
    %v1114 = vpop.f32.mrb[0].mxu0
    %v1115 = vadd.f32 %v954, %v1114
    %v1116 = vpop.f32.mrb[0].mxu0
    %v1117 = vadd.f32 %v956, %v1116
    %1118 = vmatprep.mubr.f32.mxu0 %v680
    %1119 = vmatmul.mubr.f32.gmra.mrb[0].mxu0 %v679
    %v1120 = vpop.f32.mrb[0].mxu0
    %v1121 = vadd.f32 %v960, %v1120
    %v1122 = vpop.f32.mrb[0].mxu0
    %v1123 = vadd.f32 %v962, %v1122
    %1124 = vmatprep.mubr.f32.mxu0 %v684
    %1125 = vmatmul.mubr.f32.gmra.mrb[0].mxu0 %v683
    %v1126 = vpop.f32.mrb[0].mxu0
    %v1127 = vadd.f32 %v966, %v1126
    %v1128 = vpop.f32.mrb[0].mxu0
    %v1129 = vadd.f32 %v968, %v1128
    %1130 = vmatprep.mubr.f32.mxu0 %v688
    %1131 = vmatmul.mubr.f32.gmra.mrb[0].mxu0 %v687
    %v1132 = vpop.f32.mrb[0].mxu0
    %v1133 = vadd.f32 %v972, %v1132
    %v1134 = vpop.f32.mrb[0].mxu0
    %v1135 = vadd.f32 %v974, %v1134
    %1136 = vmatprep.mubr.f32.mxu0 %v692
    %1137 = vmatmul.mubr.f32.gmra.mrb[0].mxu0 %v691
    %v1138 = vpop.f32.mrb[0].mxu0
    %v1139 = vadd.f32 %v978, %v1138
    %v1140 = vpop.f32.mrb[0].mxu0
    %v1141 = vadd.f32 %v980, %v1140
    %1142 = vmatprep.mubr.f32.mxu0 %v696
    %1143 = vmatmul.mubr.f32.gmra.mrb[0].mxu0 %v695
    %v1144 = vpop.f32.mrb[0].mxu0
    %v1145 = vadd.f32 %v984, %v1144
    %v1146 = vpop.f32.mrb[0].mxu0
    %v1147 = vadd.f32 %v986, %v1146
    %1148 = vmatprep.mubr.f32.mxu0 %v700
    %1149 = vmatmul.mubr.f32.gmra.mrb[0].mxu0 %v699
    %v1150 = vpop.f32.mrb[0].mxu0
    %v1151 = vadd.f32 %v990, %v1150
    %v1152 = vpop.f32.mrb[0].mxu0
    %v1153 = vadd.f32 %v992, %v1152
    %1154 = vmatprep.mubr.f32.mxu0 %v704
    %1155 = vmatmul.mubr.f32.gmra.mrb[0].mxu0 %v703
    %v1156 = vpop.f32.mrb[0].mxu0
    %v1157 = vadd.f32 %v996, %v1156
    %v1158 = vpop.f32.mrb[0].mxu0
    %v1159 = vadd.f32 %v998, %v1158
    %1160 = vmatprep.mubr.f32.mxu0 %v708
    %1161 = vmatmul.mubr.f32.gmra.mrb[0].mxu0 %v707
    %v1162 = vpop.f32.mrb[0].mxu0
    %v1163 = vadd.f32 %v1002, %v1162
    %v1164 = vpop.f32.mrb[0].mxu0
    %v1165 = vadd.f32 %v1004, %v1164
    %1166 = vmatprep.mubr.f32.mxu0 %v712
    %1167 = vmatmul.mubr.f32.gmra.mrb[0].mxu0 %v711
    %v1168 = vpop.f32.mrb[0].mxu0
    %v1169 = vadd.f32 %v1008, %v1168
    %v1170 = vpop.f32.mrb[0].mxu0
    %v1171 = vadd.f32 %v1010, %v1170
    %1172 = vmatprep.mubr.f32.mxu0 %v716
    %1173 = vmatmul.mubr.f32.gmra.mrb[0].mxu0 %v715
    %v1174 = vpop.f32.mrb[0].mxu0
    %v1175 = vadd.f32 %v1014, %v1174
    %v1176 = vpop.f32.mrb[0].mxu0
    %v1177 = vadd.f32 %v1016, %v1176
    %1178 = vdwg.mxu0
    %vm1179 = vcmp.gt.f32.partialorder %v1085, 0.0
    %vm1180 = vcmp.gt.f32.partialorder %v1087, 0.0
    %vm1181 = vcmp.gt.f32.partialorder %v1091, 0.0
    %vm1182 = vcmp.gt.f32.partialorder %v1093, 0.0
    %vm1183 = vcmp.gt.f32.partialorder %v1097, 0.0
    %vm1184 = vcmp.gt.f32.partialorder %v1099, 0.0
    %vm1185 = vcmp.gt.f32.partialorder %v1103, 0.0
    %vm1186 = vcmp.gt.f32.partialorder %v1105, 0.0
    %vm1187 = vcmp.gt.f32.partialorder %v1109, 0.0
    %vm1188 = vcmp.gt.f32.partialorder %v1111, 0.0
    %vm1189 = vcmp.gt.f32.partialorder %v1115, 0.0
    %vm1190 = vcmp.gt.f32.partialorder %v1117, 0.0
    %vm1191 = vcmp.gt.f32.partialorder %v1121, 0.0
    %vm1192 = vcmp.gt.f32.partialorder %v1123, 0.0
    %vm1193 = vcmp.gt.f32.partialorder %v1127, 0.0
    %vm1194 = vcmp.gt.f32.partialorder %v1129, 0.0
    %vm1195 = vcmp.gt.f32.partialorder %v1133, 0.0
    %vm1196 = vcmp.gt.f32.partialorder %v1135, 0.0
    %vm1197 = vcmp.gt.f32.partialorder %v1139, 0.0
    %vm1198 = vcmp.gt.f32.partialorder %v1141, 0.0
    %vm1199 = vcmp.gt.f32.partialorder %v1145, 0.0
    %vm1200 = vcmp.gt.f32.partialorder %v1147, 0.0
    %vm1201 = vcmp.gt.f32.partialorder %v1151, 0.0
    %vm1202 = vcmp.gt.f32.partialorder %v1153, 0.0
    %vm1203 = vcmp.gt.f32.partialorder %v1157, 0.0
    %vm1204 = vcmp.gt.f32.partialorder %v1159, 0.0
    %vm1205 = vcmp.gt.f32.partialorder %v1163, 0.0
    %vm1206 = vcmp.gt.f32.partialorder %v1165, 0.0
    %vm1207 = vcmp.gt.f32.partialorder %v1169, 0.0
    %vm1208 = vcmp.gt.f32.partialorder %v1171, 0.0
    %vm1209 = vcmp.gt.f32.partialorder %v1175, 0.0
    %vm1210 = vcmp.gt.f32.partialorder %v1177, 0.0
    %v1211 = vmul.f32 %v1085, 0.2
    %v1212 = vmul.f32 %v1087, 0.2
    %v1213 = vmul.f32 %v1091, 0.2
    %v1214 = vmul.f32 %v1093, 0.2
    %v1215 = vmul.f32 %v1097, 0.2
    %v1216 = vmul.f32 %v1099, 0.2
    %v1217 = vmul.f32 %v1103, 0.2
    %v1218 = vmul.f32 %v1105, 0.2
    %v1219 = vmul.f32 %v1109, 0.2
    %v1220 = vmul.f32 %v1111, 0.2
    %v1221 = vmul.f32 %v1115, 0.2
    %v1222 = vmul.f32 %v1117, 0.2
    %v1223 = vmul.f32 %v1121, 0.2
    %v1224 = vmul.f32 %v1123, 0.2
    %v1225 = vmul.f32 %v1127, 0.2
    %v1226 = vmul.f32 %v1129, 0.2
    %v1227 = vmul.f32 %v1133, 0.2
    %v1228 = vmul.f32 %v1135, 0.2
    %v1229 = vmul.f32 %v1139, 0.2
    %v1230 = vmul.f32 %v1141, 0.2
    %v1231 = vmul.f32 %v1145, 0.2
    %v1232 = vmul.f32 %v1147, 0.2
    %v1233 = vmul.f32 %v1151, 0.2
    %v1234 = vmul.f32 %v1153, 0.2
    %v1235 = vmul.f32 %v1157, 0.2
    %v1236 = vmul.f32 %v1159, 0.2
    %v1237 = vmul.f32 %v1163, 0.2
    %v1238 = vmul.f32 %v1165, 0.2
    %v1239 = vmul.f32 %v1169, 0.2
    %v1240 = vmul.f32 %v1171, 0.2
    %v1241 = vmul.f32 %v1175, 0.2
    %v1242 = vmul.f32 %v1177, 0.2
    %v1243 = vsel %vm1179, %v1085, %v1211
    %v1244 = vsel %vm1180, %v1087, %v1212
    %v1245 = vsel %vm1181, %v1091, %v1213
    %v1246 = vsel %vm1182, %v1093, %v1214
    %v1247 = vsel %vm1183, %v1097, %v1215
    %v1248 = vsel %vm1184, %v1099, %v1216
    %v1249 = vsel %vm1185, %v1103, %v1217
    %v1250 = vsel %vm1186, %v1105, %v1218
    %v1251 = vsel %vm1187, %v1109, %v1219
    %v1252 = vsel %vm1188, %v1111, %v1220
    %v1253 = vsel %vm1189, %v1115, %v1221
    %v1254 = vsel %vm1190, %v1117, %v1222
    %v1255 = vsel %vm1191, %v1121, %v1223
    %v1256 = vsel %vm1192, %v1123, %v1224
    %v1257 = vsel %vm1193, %v1127, %v1225
    %v1258 = vsel %vm1194, %v1129, %v1226
    %v1259 = vsel %vm1195, %v1133, %v1227
    %v1260 = vsel %vm1196, %v1135, %v1228
    %v1261 = vsel %vm1197, %v1139, %v1229
    %v1262 = vsel %vm1198, %v1141, %v1230
    %v1263 = vsel %vm1199, %v1145, %v1231
    %v1264 = vsel %vm1200, %v1147, %v1232
    %v1265 = vsel %vm1201, %v1151, %v1233
    %v1266 = vsel %vm1202, %v1153, %v1234
    %v1267 = vsel %vm1203, %v1157, %v1235
    %v1268 = vsel %vm1204, %v1159, %v1236
    %v1269 = vsel %vm1205, %v1163, %v1237
    %v1270 = vsel %vm1206, %v1165, %v1238
    %v1271 = vsel %vm1207, %v1169, %v1239
    %v1272 = vsel %vm1208, %v1171, %v1240
    %v1273 = vsel %vm1209, %v1175, %v1241
    %v1274 = vsel %vm1210, %v1177, %v1242
    %v1275 = vld [vmem:[%s5] sm:$0x3]
    %v1277 = vlaneseq
    %v1278 = vshrl.u32 %v1277, 7
    %v1279 = vsub.s32 0, %v1278
    %v1280 = vrot.slane %v1275, %v1279
    %v1281 = vlaneseq
    %v1282 = vshrl.u32 %v1281, 7
    %v1283 = vsub.s32 1, %v1282
    %v1284 = vrot.slane %v1275, %v1283
    %v1287 = vmul.f32 %v1243, %v1280
    %v1288 = vmul.f32 %v1244, %v1284
    %v1289 = vmul.f32 %v1245, %v1280
    %v1290 = vmul.f32 %v1246, %v1284
    %v1291 = vmul.f32 %v1247, %v1280
    %v1292 = vmul.f32 %v1248, %v1284
    %v1293 = vmul.f32 %v1249, %v1280
    %v1294 = vmul.f32 %v1250, %v1284
    %v1295 = vmul.f32 %v1251, %v1280
    %v1296 = vmul.f32 %v1252, %v1284
    %v1297 = vmul.f32 %v1253, %v1280
    %v1298 = vmul.f32 %v1254, %v1284
    %v1299 = vmul.f32 %v1255, %v1280
    %v1300 = vmul.f32 %v1256, %v1284
    %v1301 = vmul.f32 %v1257, %v1280
    %v1302 = vmul.f32 %v1258, %v1284
    %v1303 = vmul.f32 %v1259, %v1280
    %v1304 = vmul.f32 %v1260, %v1284
    %v1305 = vmul.f32 %v1261, %v1280
    %v1306 = vmul.f32 %v1262, %v1284
    %v1307 = vmul.f32 %v1263, %v1280
    %v1308 = vmul.f32 %v1264, %v1284
    %v1309 = vmul.f32 %v1265, %v1280
    %v1310 = vmul.f32 %v1266, %v1284
    %v1311 = vmul.f32 %v1267, %v1280
    %v1312 = vmul.f32 %v1268, %v1284
    %v1313 = vmul.f32 %v1269, %v1280
    %v1314 = vmul.f32 %v1270, %v1284
    %v1315 = vmul.f32 %v1271, %v1280
    %v1316 = vmul.f32 %v1272, %v1284
    %v1317 = vmul.f32 %v1273, %v1280
    %v1318 = vmul.f32 %v1274, %v1284
    %v1319 = vadd.f32 %v1287, %v1288
    %1320 = vadd.xlane.f32.xlu0 %v1319
    %v1321 = vpop.xlane.xlu0 %1320
    %v1322 = vadd.f32 %v1289, %v1290
    %1323 = vadd.xlane.f32.xlu0 %v1322
    %v1324 = vpop.xlane.xlu0 %1323
    %v1325 = vadd.f32 %v1291, %v1292
    %1326 = vadd.xlane.f32.xlu0 %v1325
    %v1327 = vpop.xlane.xlu0 %1326
    %v1328 = vadd.f32 %v1293, %v1294
    %1329 = vadd.xlane.f32.xlu0 %v1328
    %v1330 = vpop.xlane.xlu0 %1329
    %v1331 = vadd.f32 %v1295, %v1296
    %1332 = vadd.xlane.f32.xlu0 %v1331
    %v1333 = vpop.xlane.xlu0 %1332
    %v1334 = vadd.f32 %v1297, %v1298
    %1335 = vadd.xlane.f32.xlu0 %v1334
    %v1336 = vpop.xlane.xlu0 %1335
    %v1337 = vadd.f32 %v1299, %v1300
    %1338 = vadd.xlane.f32.xlu0 %v1337
    %v1339 = vpop.xlane.xlu0 %1338
    %v1340 = vadd.f32 %v1301, %v1302
    %1341 = vadd.xlane.f32.xlu0 %v1340
    %v1342 = vpop.xlane.xlu0 %1341
    %v1343 = vadd.f32 %v1303, %v1304
    %1344 = vadd.xlane.f32.xlu0 %v1343
    %v1345 = vpop.xlane.xlu0 %1344
    %v1346 = vadd.f32 %v1305, %v1306
    %1347 = vadd.xlane.f32.xlu0 %v1346
    %v1348 = vpop.xlane.xlu0 %1347
    %v1349 = vadd.f32 %v1307, %v1308
    %1350 = vadd.xlane.f32.xlu0 %v1349
    %v1351 = vpop.xlane.xlu0 %1350
    %v1352 = vadd.f32 %v1309, %v1310
    %1353 = vadd.xlane.f32.xlu0 %v1352
    %v1354 = vpop.xlane.xlu0 %1353
    %v1355 = vadd.f32 %v1311, %v1312
    %1356 = vadd.xlane.f32.xlu0 %v1355
    %v1357 = vpop.xlane.xlu0 %1356
    %v1358 = vadd.f32 %v1313, %v1314
    %1359 = vadd.xlane.f32.xlu0 %v1358
    %v1360 = vpop.xlane.xlu0 %1359
    %v1361 = vadd.f32 %v1315, %v1316
    %1362 = vadd.xlane.f32.xlu0 %v1361
    %v1363 = vpop.xlane.xlu0 %1362
    %v1364 = vadd.f32 %v1317, %v1318
    %1365 = vadd.xlane.f32.xlu0 %v1364
    %v1366 = vpop.xlane.xlu0 %1365
    %v1367 = vld [vmem:[#allocation2] sm:$0x1]
    %v1369 = vlaneseq
    %v1370 = vshrl.u32 %v1369, 7
    %v1371 = vsub.s32 0, %v1370
    %v1372 = vrot.slane %v1367, %v1371
    %v1374 = vadd.f32 %v1321, %v1372
    %v1375 = vadd.f32 %v1324, %v1372
    %v1376 = vadd.f32 %v1327, %v1372
    %v1377 = vadd.f32 %v1330, %v1372
    %v1378 = vadd.f32 %v1333, %v1372
    %v1379 = vadd.f32 %v1336, %v1372
    %v1380 = vadd.f32 %v1339, %v1372
    %v1381 = vadd.f32 %v1342, %v1372
    %v1382 = vadd.f32 %v1345, %v1372
    %v1383 = vadd.f32 %v1348, %v1372
    %v1384 = vadd.f32 %v1351, %v1372
    %v1385 = vadd.f32 %v1354, %v1372
    %v1386 = vadd.f32 %v1357, %v1372
    %v1387 = vadd.f32 %v1360, %v1372
    %v1388 = vadd.f32 %v1363, %v1372
    %v1389 = vadd.f32 %v1366, %v1372
    %vm1390 = vcmask 7168
    %1391 = vst.msk [vmem:[%s7] sm:$0xff] %vm1390, %v1374
    %1392 = vst.msk [vmem:[%s7 + $0x8] sm:$0xff] %vm1390, %v1375
    %1393 = vst.msk [vmem:[%s7 + $0x10] sm:$0xff] %vm1390, %v1376
    %1394 = vst.msk [vmem:[%s7 + $0x18] sm:$0xff] %vm1390, %v1377
    %1395 = vst.msk [vmem:[%s7 + $0x20] sm:$0xff] %vm1390, %v1378
    %1396 = vst.msk [vmem:[%s7 + $0x28] sm:$0xff] %vm1390, %v1379
    %1397 = vst.msk [vmem:[%s7 + $0x30] sm:$0xff] %vm1390, %v1380
    %1398 = vst.msk [vmem:[%s7 + $0x38] sm:$0xff] %vm1390, %v1381
    %1399 = vst.msk [vmem:[%s7 + $0x40] sm:$0xff] %vm1390, %v1382
    %1400 = vst.msk [vmem:[%s7 + $0x48] sm:$0xff] %vm1390, %v1383
    %1401 = vst.msk [vmem:[%s7 + $0x50] sm:$0xff] %vm1390, %v1384
    %1402 = vst.msk [vmem:[%s7 + $0x58] sm:$0xff] %vm1390, %v1385
    %1403 = vst.msk [vmem:[%s7 + $0x60] sm:$0xff] %vm1390, %v1386
    %1404 = vst.msk [vmem:[%s7 + $0x68] sm:$0xff] %vm1390, %v1387
    %1405 = vst.msk [vmem:[%s7 + $0x70] sm:$0xff] %vm1390, %v1388
    %1406 = vst.msk [vmem:[%s7 + $0x78] sm:$0xff] %vm1390, %v1389
    // Predicated region
    $region34: #{discriminator_forward.1} parent=1 // pred_check
      _
    $region35: #{discriminator_forward.1} parent=1 // pred_check_branch
      %1408 = sbr.rel (0) target = $region37
    $region36: #{discriminator_forward.1} parent=1 // pred_region
      _
    $region37: #{discriminator_forward.1} parent=1 // pred_fallthru
      _
    // Predicated region
    $region38: #{discriminator_forward.1} parent=1 // pred_check
      _
    $region39: #{discriminator_forward.1} parent=1 // pred_check_branch
      %1410 = sbr.rel (0) target = $region41
    $region40: #{discriminator_forward.1} parent=1 // pred_region
      _
    $region41: #{discriminator_forward.1} parent=1 // pred_fallthru
      _
    %1411 = vsyncpa [#allocation4], 1

</llo_original>
